<compile_context>
chip_gen: v7x
topology: tpu7x:2x2x1
jax: 0.10.0
libtpu: 0.0.40
codegen_flags: <defaults>
</compile_context>

<pallas_src>
import jax
import jax.numpy as jnp
from jax.experimental import pallas as pl
from jax.experimental.pallas import tpu as pltpu

D_IN = 18       # logical input features
P = 128         # padded feature width (lane-aligned)
MAX_TB = 1024   # max batch tile (rows per grid step)


def _round_up(x, m):
    return ((x + m - 1) // m) * m


def _pick_tile(batch):
    """Batch tile / padded batch. Single grid step unless batch > MAX_TB.

    Pads to 8 rows for tiny batches, 128 rows for larger ones so the lane-dense
    (1, tb) output row stays unmasked.
    """
    if batch >= 128:
        b_pad = _round_up(batch, 128)
    else:
        b_pad = _round_up(max(batch, 8), 8)
    tb = min(MAX_TB, b_pad)
    b_pad = _round_up(b_pad, tb)
    return tb, b_pad


def mlp_kernel(x_ref, w12_ref, b12_ref, w3_ref, b3_ref, w45_ref, b45_ref, o_ref):
    """Fused 3-matmul MLP on one (tb, 128) pre-padded bf16 batch tile."""
    x = x_ref[...]                                    # (tb, 128) bf16, lanes >= 18 are zero

    # fused layer_1∘layer_2 (no activation between them in the torch forward), then relu
    h = jnp.dot(x, w12_ref[...], preferred_element_type=jnp.float32) + b12_ref[...]
    h = jnp.maximum(h, 0.0)

    # layer_3 + relu
    h = jnp.dot(h.astype(jnp.bfloat16), w3_ref[...],
                preferred_element_type=jnp.float32) + b3_ref[...]
    h = jnp.maximum(h, 0.0)

    # fused layer_4∘layer_5 as a transposed contraction so the result lands
    # lane-dense as a (1, tb) row instead of a (tb, 1) masked column.
    y = jax.lax.dot_general(
        w45_ref[...], h.astype(jnp.bfloat16),
        dimension_numbers=(((1,), (1,)), ((), ())),
        preferred_element_type=jnp.float32)           # (1, tb)
    o_ref[0] = jax.nn.sigmoid(y + b45_ref[0, 0])


@jax.jit
def nba_mlp_forward(x, packed):
    """x: (B, 18) float. packed: folded/padded params. Returns (B, 1) f32."""
    w12, b12, w3, b3, w45, b45 = packed
    B = x.shape[0]
    tb, b_pad = _pick_tile(B)
    grid = b_pad // tb

    # bf16 activations (MXU operands are bf16 anyway), padded to a dense,
    # lane-aligned (b_pad, 128) slab -> one contiguous DMA per tile, no
    # in-kernel padding / scratch round trip.
    xp = jnp.pad(x.astype(jnp.bfloat16), ((0, b_pad - B), (0, P - D_IN)))

    const2 = lambda i: (0, 0)
    out = pl.pallas_call(
        mlp_kernel,
        out_shape=jax.ShapeDtypeStruct((grid, 1, tb), jnp.float32),
        grid_spec=pltpu.PrefetchScalarGridSpec(
            num_scalar_prefetch=0,
            grid=(grid,),
            in_specs=[
                pl.BlockSpec((tb, P), lambda i: (i, 0)),            # x tile
                pl.BlockSpec((P, P), const2),                       # W12 (resident)
                pl.BlockSpec((1, P), const2),                       # b12
                pl.BlockSpec((P, P), const2),                       # W3
                pl.BlockSpec((1, P), const2),                       # b3
                pl.BlockSpec((1, P), const2),                       # W45 (row form)
                pl.BlockSpec(memory_space=pltpu.MemorySpace.SMEM),  # b45 scalar
            ],
            out_specs=pl.BlockSpec((1, 1, tb), lambda i: (i, 0, 0)),
        ),
        # TODO(synk): on v7x a leading CORE_PARALLEL axis of size 2 could shard
        # large batches across both TensorCores; kept single-core-safe here.
        compiler_params=pltpu.CompilerParams(
            dimension_semantics=("parallel",)),
    )(xp, w12, b12, w3, b3, w45, b45)

    return out.reshape(-1)[:B].reshape(B, 1)


# ----------------------------- parameter handling -----------------------------

DIMS = [18, 180, 100, 40, 20, 1]


def init_torch_params(key):
    """PyTorch-convention Linear params: W (out, in), b (out,), U(-1/sqrt(in), 1/sqrt(in))."""
    params = []
    for li in range(5):
        fan_in, fan_out = DIMS[li], DIMS[li + 1]
        key, kw, kb = jax.random.split(key, 3)
        bound = 1.0 / (fan_in ** 0.5)
        w = jax.random.uniform(kw, (fan_out, fan_in), jnp.float32, -bound, bound)
        b = jax.random.uniform(kb, (fan_out,), jnp.float32, -bound, bound)
        params.append((w, b))
    return params


def pack_params(torch_params):
    """Fold L1∘L2 and L4∘L5 (in f32), pad to lane-aligned blocks, cast weights to bf16."""
    (w1, b1), (w2, b2), (w3, b3), (w4, b4), (w5, b5) = torch_params
    w1t, w2t, w3t, w4t, w5t = (w.T for w in (w1, w2, w3, w4, w5))
    w12 = w1t @ w2t                 # (18, 100)
    b12 = b1 @ w2t + b2             # (100,)
    w45 = (w4t @ w5t)[:, 0]         # (40,)  -- single output column as a row vector
    b45 = b4 @ w5t + b5             # (1,)

    def pad_mat(w):
        i, o = w.shape
        return jnp.zeros((P, P), jnp.float32).at[:i, :o].set(w).astype(jnp.bfloat16)

    def pad_row_f32(b):
        return jnp.zeros((1, P), jnp.float32).at[0, :b.shape[0]].set(b)

    return (pad_mat(w12), pad_row_f32(b12),
            pad_mat(w3t), pad_row_f32(b3),
            pad_row_f32(w45).astype(jnp.bfloat16),
            jnp.asarray(b45, jnp.float32).reshape(1, 1))


# --------------------------------- references ---------------------------------

def reference_forward_packed(x, packed):
    """Pure-JAX reference using the same folded/padded bf16 params (tight check)."""
    w12, b12, w3, b3, w45, b45 = packed
    xp = jnp.pad(x.astype(jnp.bfloat16), ((0, 0), (0, P - D_IN)))
    h = jnp.dot(xp, w12, preferred_element_type=jnp.float32) + b12
    h = jnp.maximum(h, 0.0)
    h = jnp.dot(h.astype(jnp.bfloat16), w3, preferred_element_type=jnp.float32) + b3
    h = jnp.maximum(h, 0.0)
    y = jnp.dot(h.astype(jnp.bfloat16), w45.T, preferred_element_type=jnp.float32) + b45[0, 0]
    return jax.nn.sigmoid(y)


def reference_forward_torch(x, torch_params):
    """Unfused full-f32 reference of the original PyTorch forward (loose check)."""
    h = x.astype(jnp.float32)
    for idx, (w, b) in enumerate(torch_params):
        h = h @ w.T + b
        if idx in (1, 2):  # relu only after layer_2 and layer_3
            h = jnp.maximum(h, 0.0)
    return jax.nn.sigmoid(h)


if __name__ == "__main__":
    key = jax.random.PRNGKey(0)
    key, kx = jax.random.split(key)

    B = 6  # small batch; padded to 8 internally
    x = jax.random.normal(kx, (B, D_IN), jnp.float32)

    torch_params = init_torch_params(jax.random.PRNGKey(0))
    packed = pack_params(torch_params)

    y = jax.block_until_ready(nba_mlp_forward(x, packed))
    assert y.shape == (B, 1), y.shape

    # Same-precision reference (folded bf16 weights, f32 accumulate): tight.
    y_same = reference_forward_packed(x, packed)
    assert jnp.allclose(y, y_same, atol=1e-4, rtol=1e-4), (y, y_same)

    # Original unfused f32 forward: loose tolerance due to bf16 matmul operands
    # and folded-layer summation-order differences.
    y_f32 = reference_forward_torch(x, torch_params)
    assert jnp.allclose(y, y_f32, atol=2e-2, rtol=0.0), (y, y_f32)

    print("KERNEL_OK")
</pallas_src>

<mosaic_0001>
module attributes {stable_mosaic.version = 11 : i64} {
  func.func @mlp_kernel(%arg0: i32, %arg1: memref<8x128xbf16, #tpu.memory_space<vmem>>, %arg2: memref<128x128xbf16, #tpu.memory_space<vmem>>, %arg3: memref<1x128xf32, #tpu.memory_space<vmem>>, %arg4: memref<128x128xbf16, #tpu.memory_space<vmem>>, %arg5: memref<1x128xf32, #tpu.memory_space<vmem>>, %arg6: memref<1x128xbf16, #tpu.memory_space<vmem>>, %arg7: memref<1x1xf32, #tpu.memory_space<smem>>, %arg8: memref<1x1x8xf32, #tpu.memory_space<vmem>>) attributes {dimension_semantics = [#tpu.dimension_semantics<parallel>], iteration_bounds = array<i64: 1>, scalar_prefetch = 0 : i64, scratch_operands = 0 : i64, tpu.core_type = #tpu.core_type<tc>, window_params = [{transform_indices = @transform_0, window_bounds = array<i64: 8, 128>}, {pipeline_mode = #tpu.pipeline_mode<synchronous>, transform_indices = @transform_1, window_bounds = array<i64: 128, 128>}, {pipeline_mode = #tpu.pipeline_mode<synchronous>, transform_indices = @transform_2, window_bounds = array<i64: 1, 128>}, {pipeline_mode = #tpu.pipeline_mode<synchronous>, transform_indices = @transform_3, window_bounds = array<i64: 128, 128>}, {pipeline_mode = #tpu.pipeline_mode<synchronous>, transform_indices = @transform_4, window_bounds = array<i64: 1, 128>}, {pipeline_mode = #tpu.pipeline_mode<synchronous>, transform_indices = @transform_5, window_bounds = array<i64: 1, 128>}, {transform_indices = @transform_6, window_bounds = array<i64: 1, 1>}, {transform_indices = @transform_7, window_bounds = array<i64: 1, 1, 8>}]} {
    %c0 = arith.constant 0 : index
    %c0_0 = arith.constant 0 : index
    %0 = vector.load %arg1[%c0, %c0_0] : memref<8x128xbf16, #tpu.memory_space<vmem>>, vector<8x128xbf16>
    %c0_1 = arith.constant 0 : index
    %c0_2 = arith.constant 0 : index
    %1 = vector.load %arg2[%c0_1, %c0_2] : memref<128x128xbf16, #tpu.memory_space<vmem>>, vector<128x128xbf16>
    %cst = arith.constant dense<0.000000e+00> : vector<8x128xf32>
    %2 = tpu.matmul %0, %1, %cst {dimension_numbers = #tpu.dot_dimension_numbers<[1], [0], [0], [1], [0, 0, 1, 1], [], []>} : vector<8x128xbf16>, vector<128x128xbf16>, vector<8x128xf32> -> vector<8x128xf32>
    %c0_3 = arith.constant 0 : index
    %c0_4 = arith.constant 0 : index
    %3 = vector.load %arg3[%c0_3, %c0_4] : memref<1x128xf32, #tpu.memory_space<vmem>>, vector<1x128xf32>
    %4 = vector.broadcast %3 : vector<1x128xf32> to vector<8x128xf32>
    %5 = arith.addf %2, %4 : vector<8x128xf32>
    %cst_5 = arith.constant 0.000000e+00 : f32
    %6 = vector.broadcast %cst_5 : f32 to vector<8x128xf32>
    %7 = arith.maximumf %5, %6 : vector<8x128xf32>
    %8 = arith.truncf %7 : vector<8x128xf32> to vector<8x128xbf16>
    %c0_6 = arith.constant 0 : index
    %c0_7 = arith.constant 0 : index
    %9 = vector.load %arg4[%c0_6, %c0_7] : memref<128x128xbf16, #tpu.memory_space<vmem>>, vector<128x128xbf16>
    %cst_8 = arith.constant dense<0.000000e+00> : vector<8x128xf32>
    %10 = tpu.matmul %8, %9, %cst_8 {dimension_numbers = #tpu.dot_dimension_numbers<[1], [0], [0], [1], [0, 0, 1, 1], [], []>} : vector<8x128xbf16>, vector<128x128xbf16>, vector<8x128xf32> -> vector<8x128xf32>
    %c0_9 = arith.constant 0 : index
    %c0_10 = arith.constant 0 : index
    %11 = vector.load %arg5[%c0_9, %c0_10] : memref<1x128xf32, #tpu.memory_space<vmem>>, vector<1x128xf32>
    %12 = vector.broadcast %11 : vector<1x128xf32> to vector<8x128xf32>
    %13 = arith.addf %10, %12 : vector<8x128xf32>
    %cst_11 = arith.constant 0.000000e+00 : f32
    %14 = vector.broadcast %cst_11 : f32 to vector<8x128xf32>
    %15 = arith.maximumf %13, %14 : vector<8x128xf32>
    %c0_12 = arith.constant 0 : index
    %c0_13 = arith.constant 0 : index
    %16 = vector.load %arg6[%c0_12, %c0_13] : memref<1x128xbf16, #tpu.memory_space<vmem>>, vector<1x128xbf16>
    %17 = arith.truncf %15 : vector<8x128xf32> to vector<8x128xbf16>
    %cst_14 = arith.constant dense<0.000000e+00> : vector<1x8xf32>
    %18 = tpu.matmul %16, %17, %cst_14 {dimension_numbers = #tpu.dot_dimension_numbers<[1], [1], [0], [0], [0, 0, 1, 0], [], []>} : vector<1x128xbf16>, vector<8x128xbf16>, vector<1x8xf32> -> vector<1x8xf32>
    %c0_15 = arith.constant 0 : index
    %c0_16 = arith.constant 0 : index
    %19 = memref.load %arg7[%c0_15, %c0_16] : memref<1x1xf32, #tpu.memory_space<smem>>
    %20 = vector.broadcast %19 : f32 to vector<1x8xf32>
    %21 = arith.addf %18, %20 : vector<1x8xf32>
    %22 = arith.negf %21 : vector<1x8xf32>
    %23 = math.exp %22 : vector<1x8xf32>
    %cst_17 = arith.constant 1.000000e+00 : f32
    %24 = vector.broadcast %cst_17 : f32 to vector<1x8xf32>
    %25 = arith.addf %24, %23 : vector<1x8xf32>
    %26 = arith.divf %24, %25 : vector<1x8xf32>
    %c0_18 = arith.constant 0 : index
    %c0_19 = arith.constant 0 : index
    %c0_20 = arith.constant 0 : index
    %27 = vector.load %arg8[%c0_18, %c0_19, %c0_20] : memref<1x1x8xf32, #tpu.memory_space<vmem>>, vector<1x1x8xf32>
    %28 = vector.shape_cast %27 : vector<1x1x8xf32> to vector<1x8xf32>
    %29 = vector.shape_cast %26 : vector<1x8xf32> to vector<1x1x8xf32>
    tpu.vector_store %arg8[%c0_18, %c0_19, %c0_20], %29 {strides = array<i32>} : memref<1x1x8xf32, #tpu.memory_space<vmem>>, vector<1x1x8xf32>,
    return
  }
  func.func @transform_0(%arg0: i32) -> (i32, i32) {
    %c0_i32 = arith.constant 0 : i32
    %c0_i32_0 = arith.constant 0 : i32
    return %arg0, %c0_i32 : i32, i32
  }
  func.func @transform_1(%arg0: i32) -> (i32, i32) {
    %c0_i32 = arith.constant 0 : i32
    %c0_i32_0 = arith.constant 0 : i32
    %c0_i32_1 = arith.constant 0 : i32
    return %c0_i32, %c0_i32_0 : i32, i32
  }
  func.func @transform_2(%arg0: i32) -> (i32, i32) {
    %c0_i32 = arith.constant 0 : i32
    %c0_i32_0 = arith.constant 0 : i32
    %c0_i32_1 = arith.constant 0 : i32
    return %c0_i32, %c0_i32_0 : i32, i32
  }
  func.func @transform_3(%arg0: i32) -> (i32, i32) {
    %c0_i32 = arith.constant 0 : i32
    %c0_i32_0 = arith.constant 0 : i32
    %c0_i32_1 = arith.constant 0 : i32
    return %c0_i32, %c0_i32_0 : i32, i32
  }
  func.func @transform_4(%arg0: i32) -> (i32, i32) {
    %c0_i32 = arith.constant 0 : i32
    %c0_i32_0 = arith.constant 0 : i32
    %c0_i32_1 = arith.constant 0 : i32
    return %c0_i32, %c0_i32_0 : i32, i32
  }
  func.func @transform_5(%arg0: i32) -> (i32, i32) {
    %c0_i32 = arith.constant 0 : i32
    %c0_i32_0 = arith.constant 0 : i32
    %c0_i32_1 = arith.constant 0 : i32
    return %c0_i32, %c0_i32_0 : i32, i32
  }
  func.func @transform_6(%arg0: i32) -> (i32, i32) {
    %c0_i32 = arith.constant 0 : i32
    %c0_i32_0 = arith.constant 0 : i32
    %c0_i32_1 = arith.constant 0 : i32
    return %c0_i32, %c0_i32_0 : i32, i32
  }
  func.func @transform_7(%arg0: i32) -> (i32, i32, i32) {
    %c0_i32 = arith.constant 0 : i32
    %c0_i32_0 = arith.constant 0 : i32
    %c0_i32_1 = arith.constant 0 : i32
    return %arg0, %c0_i32, %c0_i32_0 : i32, i32, i32
  }
}

</mosaic_0001>

<llo_original>
// kernel: nba_mlp_forward.1
$region0: #{nba_mlp_forward.1}
  #allocation0 [shape = 'u32[]', space=smem, size = 0x4, offset = 0x4, fixed_abs, tag = 'smem constant byte address 0x4 - core index']
  #allocation1 [shape = 'u32[144,128]{1,0:T(1,128)}', space=vmem, size = 0x12000, scoped, tag = 'internal scratch']
  #allocation2 [shape = 'f32[1,1]{1,0:T(1,128)S(6)}', space=smem, size = 0x200, scoped, tag = 'scoped memory for nba_mlp_forward.1']
  %s0 = inlined_call_operand.vmem [shape: bf16[8,128], index: 0, kind: input, shape index: {}]
  %s1 = inlined_call_operand.hbm [shape: bf16[128,128], index: 1, kind: input, shape index: {}]
  %s2 = inlined_call_operand.vmem [shape: f32[1,128], index: 2, kind: input, shape index: {}]
  %s3 = inlined_call_operand.hbm [shape: bf16[128,128], index: 3, kind: input, shape index: {}]
  %s4 = inlined_call_operand.vmem [shape: f32[1,128], index: 4, kind: input, shape index: {}]
  %s5 = inlined_call_operand.vmem [shape: bf16[1,128], index: 5, kind: input, shape index: {}]
  %s6 = inlined_call_operand.<no memory space> [shape: f32[1,1], index: 6, kind: input, shape index: {}]
  %s7 = inlined_call_operand.vmem [shape: f32[1,1,8], index: 7, kind: output, shape index: {}]
  %s8 = sld [smem:[#allocation0]]
  $region46: #{nba_mlp_forward.1} parent=0
    _
  %s10 = ssub.s32 1, %s8
  %s11 = scalar_select 0, %s10, %s8
  %12 = sst [smem:[#allocation2]] %s6
  $region1: #{nba_mlp_forward.1} parent=0
    #allocation3 [shape = 'u8[32768]{0}', space=vmem, size = 0x8000, scoped, tag = 'input window, operand 1, single buffered']
    #allocation4 [shape = 's32[1]{0}', space=sflag, size = 0x4, scoped, tag = 'scoped memory for nba_mlp_forward.1']
    #allocation5 [shape = 'u8[32768]{0}', space=vmem, size = 0x8000, scoped, tag = 'input window, operand 3, single buffered']
    #allocation6 [shape = 's32[1]{0}', space=sflag, size = 0x4, scoped, tag = 'scoped memory for nba_mlp_forward.1']
    %13 = vsyncpa [#allocation4], 0
    %14 = vsyncpa [#allocation6], 0
    // Predicated region
    $region2: #{nba_mlp_forward.1} parent=1 // pred_check
      _
    $region3: #{nba_mlp_forward.1} parent=1 // pred_check_branch
      %16 = sbr.rel (0) target = $region5
    $region4: #{nba_mlp_forward.1} parent=1 // pred_region
      _
    $region5: #{nba_mlp_forward.1} parent=1 // pred_fallthru
      _
    // Predicated region
    $region6: #{nba_mlp_forward.1} parent=1 // pred_check
      _
    $region7: #{nba_mlp_forward.1} parent=1 // pred_check_branch
      %18 = sbr.rel (0) target = $region9
    $region8: #{nba_mlp_forward.1} parent=1 // pred_region
      %s20 = ssub.s32 1024, 1024
      %21 = vsyncadd [#allocation4], %s20
      %s22 = sshll.u32 [#allocation3], 4
      %s23 = int_to_ptr.vmem [resolvable:$true] %s22
      %28 = dma.hbm_to_vmem [thread:$0]  %s1, 1024, %s23, [#allocation4], 64, 64, 4
    $region9: #{nba_mlp_forward.1} parent=1 // pred_fallthru
      _
    // Predicated region
    $region10: #{nba_mlp_forward.1} parent=1 // pred_check
      _
    $region11: #{nba_mlp_forward.1} parent=1 // pred_check_branch
      %30 = sbr.rel (0) target = $region13
    $region12: #{nba_mlp_forward.1} parent=1 // pred_region
      _
    $region13: #{nba_mlp_forward.1} parent=1 // pred_fallthru
      _
    // Predicated region
    $region14: #{nba_mlp_forward.1} parent=1 // pred_check
      _
    $region15: #{nba_mlp_forward.1} parent=1 // pred_check_branch
      %32 = sbr.rel (0) target = $region17
    $region16: #{nba_mlp_forward.1} parent=1 // pred_region
      %s34 = ssub.s32 1024, 1024
      %35 = vsyncadd [#allocation6], %s34
      %s36 = sshll.u32 [#allocation5], 4
      %s37 = int_to_ptr.vmem [resolvable:$true] %s36
      %42 = dma.hbm_to_vmem [thread:$0]  %s3, 1024, %s37, [#allocation6], 64, 64, 4
    $region17: #{nba_mlp_forward.1} parent=1 // pred_fallthru
      _
    // Predicated region
    $region18: #{nba_mlp_forward.1} parent=1 // pred_check
      _
    $region19: #{nba_mlp_forward.1} parent=1 // pred_check_branch
      %44 = sbr.rel (0) target = $region21
    $region20: #{nba_mlp_forward.1} parent=1 // pred_region
      _
    $region21: #{nba_mlp_forward.1} parent=1 // pred_fallthru
      _
    // Predicated region
    $region22: #{nba_mlp_forward.1} parent=1 // pred_check
      _
    $region23: #{nba_mlp_forward.1} parent=1 // pred_check_branch
      %46 = sbr.rel (0) target = $region25
    $region24: #{nba_mlp_forward.1} parent=1 // pred_region
      _
    $region25: #{nba_mlp_forward.1} parent=1 // pred_fallthru
      _
    // Predicated region
    $region26: #{nba_mlp_forward.1} parent=1 // pred_check
      _
    $region27: #{nba_mlp_forward.1} parent=1 // pred_check_branch
      %48 = sbr.rel (0) target = $region29
    $region28: #{nba_mlp_forward.1} parent=1 // pred_region
      _
    $region29: #{nba_mlp_forward.1} parent=1 // pred_fallthru
      _
    // Predicated region
    $region30: #{nba_mlp_forward.1} parent=1 // pred_check
      _
    $region31: #{nba_mlp_forward.1} parent=1 // pred_check_branch
      %50 = sbr.rel (0) target = $region33
    $region32: #{nba_mlp_forward.1} parent=1 // pred_region
      %51 = dma.done [#allocation4], 1024
    $region33: #{nba_mlp_forward.1} parent=1 // pred_fallthru
      _
    // Predicated region
    $region34: #{nba_mlp_forward.1} parent=1 // pred_check
      _
    $region35: #{nba_mlp_forward.1} parent=1 // pred_check_branch
      %53 = sbr.rel (0) target = $region37
    $region36: #{nba_mlp_forward.1} parent=1 // pred_region
      %54 = dma.done [#allocation6], 1024
    $region37: #{nba_mlp_forward.1} parent=1 // pred_fallthru
      _
    %v56 = vld [vmem:[%s0] sm:$0xf]
    %v57 = vld [vmem:[#allocation3] sm:$0xf]
    %v58 = vld [vmem:[#allocation3 + $0x4] sm:$0xf]
    %v59 = vld [vmem:[#allocation3 + $0x8] sm:$0xf]
    %v60 = vld [vmem:[#allocation3 + $0xc] sm:$0xf]
    %v61 = vld [vmem:[#allocation3 + $0x10] sm:$0xf]
    %v62 = vld [vmem:[#allocation3 + $0x14] sm:$0xf]
    %v63 = vld [vmem:[#allocation3 + $0x18] sm:$0xf]
    %v64 = vld [vmem:[#allocation3 + $0x1c] sm:$0xf]
    %v65 = vld [vmem:[#allocation3 + $0x20] sm:$0xf]
    %v66 = vld [vmem:[#allocation3 + $0x24] sm:$0xf]
    %v67 = vld [vmem:[#allocation3 + $0x28] sm:$0xf]
    %v68 = vld [vmem:[#allocation3 + $0x2c] sm:$0xf]
    %v69 = vld [vmem:[#allocation3 + $0x30] sm:$0xf]
    %v70 = vld [vmem:[#allocation3 + $0x34] sm:$0xf]
    %v71 = vld [vmem:[#allocation3 + $0x38] sm:$0xf]
    %v72 = vld [vmem:[#allocation3 + $0x3c] sm:$0xf]
    %v73 = vld [vmem:[%s2] sm:$0x1]
    %v75 = vlaneseq
    %v76 = vshrl.u32 %v75, 7
    %v77 = vsub.s32 0, %v76
    %v78 = vrot.slane %v73, %v77
    %v96 = vunpack.c.l.b16 %v57
    %v97 = vunpack.c.l.b16 %v58
    %v98 = vunpack.c.l.b16 %v59
    %v99 = vunpack.c.l.b16 %v60
    %v100 = vunpack.c.l.b16 %v61
    %v101 = vunpack.c.l.b16 %v62
    %v102 = vunpack.c.l.b16 %v63
    %v103 = vunpack.c.l.b16 %v64
    %v104 = vunpack.c.l.b16 %v65
    %v105 = vunpack.c.l.b16 %v66
    %v106 = vunpack.c.l.b16 %v67
    %v107 = vunpack.c.l.b16 %v68
    %v108 = vunpack.c.l.b16 %v69
    %v109 = vunpack.c.l.b16 %v70
    %v110 = vunpack.c.l.b16 %v71
    %v111 = vunpack.c.l.b16 %v72
    %v112 = vpack.c.b16 %v97, %v96
    %v113 = vpack.c.b16 %v99, %v98
    %v114 = vpack.c.b16 %v101, %v100
    %v115 = vpack.c.b16 %v103, %v102
    %v116 = vpack.c.b16 %v105, %v104
    %v117 = vpack.c.b16 %v107, %v106
    %v118 = vpack.c.b16 %v109, %v108
    %v119 = vpack.c.b16 %v111, %v110
    %128 = vmatprep.subr.bf16.mxu0 0
    %129 = vmatpush1.bf16.msra.mxu0 %v112
    %130 = vmatprep.subr.bf16.mxu0 0
    %131 = vmatpush1.bf16.msra.mxu0 %v113
    %132 = vmatprep.subr.bf16.mxu0 0
    %133 = vmatpush1.bf16.msra.mxu0 %v114
    %134 = vmatprep.subr.bf16.mxu0 0
    %135 = vmatpush1.bf16.msra.mxu0 %v115
    %136 = vmatprep.subr.bf16.mxu0 0
    %137 = vmatpush1.bf16.msra.mxu0 %v116
    %138 = vmatprep.subr.bf16.mxu0 0
    %139 = vmatpush1.bf16.msra.mxu0 %v117
    %140 = vmatprep.subr.bf16.mxu0 0
    %141 = vmatpush1.bf16.msra.mxu0 %v118
    %142 = vmatprep.subr.bf16.mxu0 0
    %143 = vmatpush1.bf16.msra.mxu0 %v119
    %144 = vmatprep.subr.bf16.mxu0 0
    %145 = vmatpush1.bf16.msra.mxu0 0
    %146 = vmatprep.subr.bf16.mxu0 0
    %147 = vmatpush1.bf16.msra.mxu0 0
    %148 = vmatprep.subr.bf16.mxu0 0
    %149 = vmatpush1.bf16.msra.mxu0 0
    %150 = vmatprep.subr.bf16.mxu0 0
    %151 = vmatpush1.bf16.msra.mxu0 0
    %152 = vmatprep.subr.bf16.mxu0 0
    %153 = vmatpush1.bf16.msra.mxu0 0
    %154 = vmatprep.subr.bf16.mxu0 0
    %155 = vmatpush1.bf16.msra.mxu0 0
    %156 = vmatprep.subr.bf16.mxu0 0
    %157 = vmatpush1.bf16.msra.mxu0 0
    %158 = vmatprep.subr.bf16.mxu0 0
    %159 = vmatpush1.bf16.msra.mxu0 0
    %160 = vmatprep.mubr.bf16.mxu0 0
    %161 = vmatmul.mubr.bf16.gmra.mrb[0].mxu0 %v56
    %v162 = vpop.f32.mrb[0].mxu0
    %v163 = vadd.f32 %v78, %v162
    %v164 = vpop.f32.mrb[0].mxu0
    %v165 = vpop.f32.mrb[0].mxu0
    %v166 = vpop.f32.mrb[0].mxu0
    %167 = vdwg.mxu0
    %v168 = vmax.f32 %v163, 0.0
    %v169 = vpack.c.bf16 %v168, %v168
    %v170 = vld [vmem:[#allocation5] sm:$0xf]
    %v171 = vld [vmem:[#allocation5 + $0x4] sm:$0xf]
    %v172 = vld [vmem:[#allocation5 + $0x8] sm:$0xf]
    %v173 = vld [vmem:[#allocation5 + $0xc] sm:$0xf]
    %v174 = vld [vmem:[#allocation5 + $0x10] sm:$0xf]
    %v175 = vld [vmem:[#allocation5 + $0x14] sm:$0xf]
    %v176 = vld [vmem:[#allocation5 + $0x18] sm:$0xf]
    %v177 = vld [vmem:[#allocation5 + $0x1c] sm:$0xf]
    %v178 = vld [vmem:[#allocation5 + $0x20] sm:$0xf]
    %v179 = vld [vmem:[#allocation5 + $0x24] sm:$0xf]
    %v180 = vld [vmem:[#allocation5 + $0x28] sm:$0xf]
    %v181 = vld [vmem:[#allocation5 + $0x2c] sm:$0xf]
    %v182 = vld [vmem:[#allocation5 + $0x30] sm:$0xf]
    %v183 = vld [vmem:[#allocation5 + $0x34] sm:$0xf]
    %v184 = vld [vmem:[#allocation5 + $0x38] sm:$0xf]
    %v185 = vld [vmem:[#allocation5 + $0x3c] sm:$0xf]
    %v186 = vld [vmem:[%s4] sm:$0x1]
    %v188 = vlaneseq
    %v189 = vshrl.u32 %v188, 7
    %v190 = vsub.s32 0, %v189
    %v191 = vrot.slane %v186, %v190
    %v209 = vunpack.c.l.b16 %v170
    %v210 = vunpack.c.l.b16 %v171
    %v211 = vunpack.c.l.b16 %v172
    %v212 = vunpack.c.l.b16 %v173
    %v213 = vunpack.c.l.b16 %v174
    %v214 = vunpack.c.l.b16 %v175
    %v215 = vunpack.c.l.b16 %v176
    %v216 = vunpack.c.l.b16 %v177
    %v217 = vunpack.c.l.b16 %v178
    %v218 = vunpack.c.l.b16 %v179
    %v219 = vunpack.c.l.b16 %v180
    %v220 = vunpack.c.l.b16 %v181
    %v221 = vunpack.c.l.b16 %v182
    %v222 = vunpack.c.l.b16 %v183
    %v223 = vunpack.c.l.b16 %v184
    %v224 = vunpack.c.l.b16 %v185
    %v225 = vpack.c.b16 %v210, %v209
    %v226 = vpack.c.b16 %v212, %v211
    %v227 = vpack.c.b16 %v214, %v213
    %v228 = vpack.c.b16 %v216, %v215
    %v229 = vpack.c.b16 %v218, %v217
    %v230 = vpack.c.b16 %v220, %v219
    %v231 = vpack.c.b16 %v222, %v221
    %v232 = vpack.c.b16 %v224, %v223
    %241 = vmatprep.subr.bf16.mxu0 0
    %242 = vmatpush1.bf16.msra.mxu0 %v225
    %243 = vmatprep.subr.bf16.mxu0 0
    %244 = vmatpush1.bf16.msra.mxu0 %v226
    %245 = vmatprep.subr.bf16.mxu0 0
    %246 = vmatpush1.bf16.msra.mxu0 %v227
    %247 = vmatprep.subr.bf16.mxu0 0
    %248 = vmatpush1.bf16.msra.mxu0 %v228
    %249 = vmatprep.subr.bf16.mxu0 0
    %250 = vmatpush1.bf16.msra.mxu0 %v229
    %251 = vmatprep.subr.bf16.mxu0 0
    %252 = vmatpush1.bf16.msra.mxu0 %v230
    %253 = vmatprep.subr.bf16.mxu0 0
    %254 = vmatpush1.bf16.msra.mxu0 %v231
    %255 = vmatprep.subr.bf16.mxu0 0
    %256 = vmatpush1.bf16.msra.mxu0 %v232
    %257 = vmatprep.subr.bf16.mxu0 0
    %258 = vmatpush1.bf16.msra.mxu0 0
    %259 = vmatprep.subr.bf16.mxu0 0
    %260 = vmatpush1.bf16.msra.mxu0 0
    %261 = vmatprep.subr.bf16.mxu0 0
    %262 = vmatpush1.bf16.msra.mxu0 0
    %263 = vmatprep.subr.bf16.mxu0 0
    %264 = vmatpush1.bf16.msra.mxu0 0
    %265 = vmatprep.subr.bf16.mxu0 0
    %266 = vmatpush1.bf16.msra.mxu0 0
    %267 = vmatprep.subr.bf16.mxu0 0
    %268 = vmatpush1.bf16.msra.mxu0 0
    %269 = vmatprep.subr.bf16.mxu0 0
    %270 = vmatpush1.bf16.msra.mxu0 0
    %271 = vmatprep.subr.bf16.mxu0 0
    %272 = vmatpush1.bf16.msra.mxu0 0
    %273 = vmatprep.mubr.bf16.mxu0 0
    %274 = vmatmul.mubr.bf16.gmra.mrb[0].mxu0 %v169
    %v275 = vpop.f32.mrb[0].mxu0
    %v276 = vadd.f32 %v191, %v275
    %v277 = vpop.f32.mrb[0].mxu0
    %v278 = vpop.f32.mrb[0].mxu0
    %v279 = vpop.f32.mrb[0].mxu0
    %280 = vdwg.mxu0
    %v281 = vmax.f32 %v276, 0.0
    %v282 = vld [vmem:[%s5] sm:$0x1]
    %v283 = vpack.c.bf16 %v281, %v281
    %s284 = sld [smem:[#allocation2]]
    %v285 = vstv %s284
    %286 = vmatprep.subr.bf16.mxu0 0
    %287 = vmatpush1.bf16.xpose.msra.mxu0 %v283
    %288 = vmatprep.subr.bf16.mxu0 0
    %289 = vmatpush1.bf16.xpose.msra.mxu0 0
    %290 = vmatprep.subr.bf16.mxu0 0
    %291 = vmatpush1.bf16.xpose.msra.mxu0 0
    %292 = vmatprep.subr.bf16.mxu0 0
    %293 = vmatpush1.bf16.xpose.msra.mxu0 0
    %294 = vmatprep.subr.bf16.mxu0 0
    %295 = vmatpush1.bf16.xpose.msra.mxu0 0
    %296 = vmatprep.subr.bf16.mxu0 0
    %297 = vmatpush1.bf16.xpose.msra.mxu0 0
    %298 = vmatprep.subr.bf16.mxu0 0
    %299 = vmatpush1.bf16.xpose.msra.mxu0 0
    %300 = vmatprep.subr.bf16.mxu0 0
    %301 = vmatpush1.bf16.xpose.msra.mxu0 0
    %302 = vmatprep.subr.bf16.mxu0 0
    %303 = vmatpush1.bf16.xpose.msra.mxu0 0
    %304 = vmatprep.subr.bf16.mxu0 0
    %305 = vmatpush1.bf16.xpose.msra.mxu0 0
    %306 = vmatprep.subr.bf16.mxu0 0
    %307 = vmatpush1.bf16.xpose.msra.mxu0 0
    %308 = vmatprep.subr.bf16.mxu0 0
    %309 = vmatpush1.bf16.xpose.msra.mxu0 0
    %310 = vmatprep.subr.bf16.mxu0 0
    %311 = vmatpush1.bf16.xpose.msra.mxu0 0
    %312 = vmatprep.subr.bf16.mxu0 0
    %313 = vmatpush1.bf16.xpose.msra.mxu0 0
    %314 = vmatprep.subr.bf16.mxu0 0
    %315 = vmatpush1.bf16.xpose.msra.mxu0 0
    %316 = vmatprep.subr.bf16.mxu0 0
    %317 = vmatpush1.bf16.xpose.msra.mxu0 0
    %318 = vmatprep.mubr.bf16.mxu0 0
    %319 = vmatmul.mubr.bf16.gmra.mrb[0].mxu0 %v282
    %v320 = vpop.f32.mrb[0].mxu0
    %v321 = vadd.f32 %v285, %v320
    %v322 = vpop.f32.mrb[0].mxu0
    %v323 = vpop.f32.mrb[0].mxu0
    %v324 = vpop.f32.mrb[0].mxu0
    %325 = vdwg.mxu0
    %v326 = vxor.u32 %v321, 2147483648
    %v327 = vmul.f32 %v326, 1.442695
    %v328 = vpow.pop %v327
    %v329 = vadd.f32 %v328, 1.0
    %v330 = vrcp.pop %v329
    %v331 = vmul.f32 1.0, %v330
    %vm332 = vcmask 57344
    %333 = vst.msk [vmem:[%s7] sm:$0x1] %vm332, %v331
    // Predicated region
    $region38: #{nba_mlp_forward.1} parent=1 // pred_check
      _
    $region39: #{nba_mlp_forward.1} parent=1 // pred_check_branch
      %335 = sbr.rel (0) target = $region41
    $region40: #{nba_mlp_forward.1} parent=1 // pred_region
      _
    $region41: #{nba_mlp_forward.1} parent=1 // pred_fallthru
      _
    // Predicated region
    $region42: #{nba_mlp_forward.1} parent=1 // pred_check
      _
    $region43: #{nba_mlp_forward.1} parent=1 // pred_check_branch
      %337 = sbr.rel (0) target = $region45
    $region44: #{nba_mlp_forward.1} parent=1 // pred_region
      _
    $region45: #{nba_mlp_forward.1} parent=1 // pred_fallthru
      _
    %338 = vsyncpa [#allocation4], 1
    %339 = vsyncpa [#allocation6], 1

</llo_original>
